<compile_context>
chip_gen: v7x
topology: tpu7x:2x2x1
jax: 0.10.0
libtpu: 0.0.40
codegen_flags: <defaults>
</compile_context>

<pallas_src>
import functools

import jax
import jax.numpy as jnp
from jax.experimental import pallas as pl
from jax.experimental.pallas import tpu as pltpu


def _gmm_logpdf_kernel(y_ref, p_ref, o_ref, *, num_comps):
    # y_ref: (tile_b, tile_nc)        observations
    # p_ref: (rows_pad, tile_nc)      packed params, rows grouped per component:
    #          row 3k   : c_k   = logw_k - log(sd_k) - 0.5*log(2*pi)
    #          row 3k+1 : mu_k
    #          row 3k+2 : inv_k = sqrt(0.5) / sd_k
    # o_ref: (tile_b, tile_nc)        mixture log-pdf
    K = num_comps
    y = y_ref[...].astype(jnp.float32)

    def comp_lp(k):
        c = p_ref[3 * k:3 * k + 1, :]            # (1, tile_nc)
        mu = p_ref[3 * k + 1:3 * k + 2, :]       # (1, tile_nc)
        inv = p_ref[3 * k + 2:3 * k + 3, :]      # (1, tile_nc)
        z = (y - mu) * inv                       # 0.5 already folded into inv
        return c - z * z                         # (tile_b, tile_nc), f32

    if K == 1:
        lse = comp_lp(0)
    elif K == 2:
        # Pairwise logsumexp: one exp, one log1p, exp(max - max)=1 never computed.
        lp0 = comp_lp(0)
        lp1 = comp_lp(1)
        m = jnp.maximum(lp0, lp1)
        d = jnp.abs(lp0 - lp1)
        lse = m + jnp.log1p(jnp.exp(-d))
    else:
        # Online (running-max) logsumexp: only (m, acc) stay live.
        m = comp_lp(0)
        acc = jnp.ones_like(m)
        for k in range(1, K):
            lp = comp_lp(k)
            m_new = jnp.maximum(m, lp)
            acc = acc * jnp.exp(m - m_new) + jnp.exp(lp - m_new)
            m = m_new
        lse = m + jnp.log(acc)

    o_ref[...] = lse.astype(o_ref.dtype)


def _vmem_limit_bytes():
    """Explicit scoped-VMEM limit sized from the chip's physical VMEM."""
    phys = 128 * 1024 * 1024
    try:
        info = pltpu.get_tpu_info()
        cap = getattr(info, "vmem_capacity_bytes", None)
        if cap:
            phys = int(cap)
    except Exception:
        pass
    # Half of physical, capped at 64 MiB (=> 32 MiB on v7x's 64 MiB VMEM).
    return min(phys // 2, 64 * 1024 * 1024)


def _choose_tile_b(B, tile_nc, in_bytes, out_bytes, budget):
    """Largest batch tile (multiple of 8, <=1024) whose double-buffered y/out
    tiles plus a few f32 temporaries fit the VMEM budget.  No forced 2-step
    split: grid steps are a sequential loop on a single TC (v5e/v6e)."""
    if B < 8:
        return B  # full-dim block (allowed regardless of the 8-row rule)
    bytes_per_row = tile_nc * (2 * in_bytes + 2 * out_bytes + 3 * 4)
    tb = budget // max(bytes_per_row, 1)
    tb = int(min(tb, 1024, ((B + 7) // 8) * 8))
    return max(8, (tb // 8) * 8)


def gmm_logpdf(y, m, s, w, eps=1e-6, tile_b=None, tile_nc=None):
    """Pallas-backed equivalent of GMMProp.forward(y) with y of shape (B, nc)."""
    nc, K = m.shape
    B = y.shape[0]
    out_dtype = y.dtype

    # Tiny per-channel preprocessing in plain JAX, float32 throughout.
    m32 = m.astype(jnp.float32)
    sd = jax.nn.softplus(s.astype(jnp.float32)) + eps            # (nc, K)
    logw = jax.nn.log_softmax(w.astype(jnp.float32), axis=-1)    # (nc, K)
    c = logw - jnp.log(sd) - 0.5 * jnp.log(2.0 * jnp.pi)         # folded const
    inv_scaled = jnp.sqrt(0.5) / sd                              # 0.5 folded in

    # Pack per component (c_k, mu_k, inv_k) as adjacent rows: (K,3,nc)->(3K,nc),
    # then pad rows to a multiple of 8 sublanes.
    params = jnp.stack([c.T, m32.T, inv_scaled.T], axis=1).reshape(3 * K, nc)
    rows = 3 * K
    rows_pad = ((rows + 7) // 8) * 8
    if rows_pad != rows:
        params = jnp.pad(params, ((0, rows_pad - rows), (0, 0)))

    # Lane-dense output: pad channels to a multiple of 128 only when nc is
    # large and misaligned (for nc <= 128 the full-dim block is fine as-is).
    pad_c = 0
    if nc > 128 and nc % 128 != 0:
        pad_c = (-nc) % 128
        y = jnp.pad(y, ((0, 0), (0, pad_c)))
        params = jnp.pad(params, ((0, 0), (0, pad_c)))
    nc_eff = nc + pad_c

    # Channel tiling (second parallel grid axis) for large, lane-aligned nc.
    if tile_nc is None:
        tile_nc = 512 if (nc_eff % 128 == 0 and nc_eff >= 1024) else nc_eff

    in_bytes = jnp.dtype(y.dtype).itemsize
    out_bytes = jnp.dtype(out_dtype).itemsize
    vmem_limit = _vmem_limit_bytes()
    if tile_b is None:
        tile_b = _choose_tile_b(B, tile_nc, in_bytes, out_bytes,
                                int(0.7 * vmem_limit))

    # No batch padding: ragged last tile's out-of-range rows are read as
    # garbage (finite-op kernel, no traps) and their writes are discarded.
    grid = (pl.cdiv(B, tile_b), pl.cdiv(nc_eff, tile_nc))

    out = pl.pallas_call(
        functools.partial(_gmm_logpdf_kernel, num_comps=K),
        out_shape=jax.ShapeDtypeStruct((B, nc_eff), out_dtype),
        grid=grid,
        in_specs=[
            pl.BlockSpec((tile_b, tile_nc), lambda i, j: (i, j)),   # y tile
            pl.BlockSpec((rows_pad, tile_nc), lambda i, j: (0, j)),  # params
        ],
        out_specs=pl.BlockSpec((tile_b, tile_nc), lambda i, j: (i, j)),
        compiler_params=pltpu.CompilerParams(
            dimension_semantics=("parallel", "parallel"),
            vmem_limit_bytes=vmem_limit),
    )(y, params)

    return out[:, :nc] if pad_c else out


def _reference_logpdf(y, m, s, w, eps=1e-6):
    sd = jax.nn.softplus(s) + eps
    logw = jax.nn.log_softmax(w, axis=-1)
    z = (y[..., None] - m[None, :, :]) / sd[None, :, :]
    comp_lp = -0.5 * z * z - jnp.log(sd)[None, :, :] - 0.5 * jnp.log(2.0 * jnp.pi)
    return jax.scipy.special.logsumexp(logw[None, :, :] + comp_lp, axis=-1)


if __name__ == "__main__":
    key = jax.random.PRNGKey(0)
    k_m, k_s, k_w, k_y = jax.random.split(key, 4)

    nc = 128          # channel count (lane-aligned)
    num_comps = 2     # mixture components (GMMProp default)
    batch = 16        # batch of y values per channel

    # Deterministic parameter init (matches torch.randn(nc, num_comps) shapes).
    m = jax.random.normal(k_m, (nc, num_comps), dtype=jnp.float32)
    s = jax.random.normal(k_s, (nc, num_comps), dtype=jnp.float32)
    w = jax.random.normal(k_w, (nc, num_comps), dtype=jnp.float32)
    y = jax.random.normal(k_y, (batch, nc), dtype=jnp.float32)

    out = jax.block_until_ready(gmm_logpdf(y, m, s, w))

    ref = _reference_logpdf(y, m, s, w)
    assert out.shape == (batch, nc)
    assert jnp.allclose(out, ref, atol=1e-4, rtol=1e-4), float(
        jnp.max(jnp.abs(out - ref)))

    print("KERNEL_OK")
</pallas_src>

<mosaic_0001>
module attributes {stable_mosaic.version = 11 : i64} {
  func.func @_gmm_logpdf_kernel(%arg0: i32, %arg1: i32, %arg2: memref<16x128xf32, #tpu.memory_space<vmem>>, %arg3: memref<8x128xf32, #tpu.memory_space<vmem>>, %arg4: memref<16x128xf32, #tpu.memory_space<vmem>>) attributes {dimension_semantics = [#tpu.dimension_semantics<parallel>, #tpu.dimension_semantics<parallel>], iteration_bounds = array<i64: 1, 1>, scalar_prefetch = 0 : i64, scratch_operands = 0 : i64, tpu.core_type = #tpu.core_type<tc>, window_params = [{transform_indices = @transform_0, window_bounds = array<i64: 16, 128>}, {transform_indices = @transform_1, window_bounds = array<i64: 8, 128>}, {transform_indices = @transform_2, window_bounds = array<i64: 16, 128>}]} {
    %c0 = arith.constant 0 : index
    %c0_0 = arith.constant 0 : index
    %0 = vector.load %arg2[%c0, %c0_0] : memref<16x128xf32, #tpu.memory_space<vmem>>, vector<16x128xf32>
    %c0_1 = arith.constant 0 : index
    %c0_2 = arith.constant 0 : index
    %1 = vector.load %arg3[%c0_1, %c0_2] : memref<8x128xf32, #tpu.memory_space<vmem>>, vector<1x128xf32>
    %c1 = arith.constant 1 : index
    %c0_3 = arith.constant 0 : index
    %2 = vector.load %arg3[%c1, %c0_3] : memref<8x128xf32, #tpu.memory_space<vmem>>, vector<1x128xf32>
    %c2 = arith.constant 2 : index
    %c0_4 = arith.constant 0 : index
    %3 = vector.load %arg3[%c2, %c0_4] : memref<8x128xf32, #tpu.memory_space<vmem>>, vector<1x128xf32>
    %4 = vector.broadcast %2 : vector<1x128xf32> to vector<16x128xf32>
    %5 = arith.subf %0, %4 : vector<16x128xf32>
    %6 = vector.broadcast %3 : vector<1x128xf32> to vector<16x128xf32>
    %7 = arith.mulf %5, %6 : vector<16x128xf32>
    %8 = arith.mulf %7, %7 : vector<16x128xf32>
    %9 = vector.broadcast %1 : vector<1x128xf32> to vector<16x128xf32>
    %10 = arith.subf %9, %8 : vector<16x128xf32>
    %c3 = arith.constant 3 : index
    %c0_5 = arith.constant 0 : index
    %11 = vector.load %arg3[%c3, %c0_5] : memref<8x128xf32, #tpu.memory_space<vmem>>, vector<1x128xf32>
    %c4 = arith.constant 4 : index
    %c0_6 = arith.constant 0 : index
    %12 = vector.load %arg3[%c4, %c0_6] : memref<8x128xf32, #tpu.memory_space<vmem>>, vector<1x128xf32>
    %c5 = arith.constant 5 : index
    %c0_7 = arith.constant 0 : index
    %13 = vector.load %arg3[%c5, %c0_7] : memref<8x128xf32, #tpu.memory_space<vmem>>, vector<1x128xf32>
    %14 = vector.broadcast %12 : vector<1x128xf32> to vector<16x128xf32>
    %15 = arith.subf %0, %14 : vector<16x128xf32>
    %16 = vector.broadcast %13 : vector<1x128xf32> to vector<16x128xf32>
    %17 = arith.mulf %15, %16 : vector<16x128xf32>
    %18 = arith.mulf %17, %17 : vector<16x128xf32>
    %19 = vector.broadcast %11 : vector<1x128xf32> to vector<16x128xf32>
    %20 = arith.subf %19, %18 : vector<16x128xf32>
    %21 = arith.maximumf %10, %20 : vector<16x128xf32>
    %22 = arith.subf %10, %20 : vector<16x128xf32>
    %23 = math.absf %22 : vector<16x128xf32>
    %cst = arith.constant 0.000000e+00 : f32
    %24 = vector.broadcast %cst : f32 to vector<16x128xf32>
    %25 = arith.subf %24, %23 : vector<16x128xf32>
    %26 = math.exp %25 : vector<16x128xf32>
    %27 = math.log1p %26 : vector<16x128xf32>
    %28 = arith.addf %21, %27 : vector<16x128xf32>
    %c0_8 = arith.constant 0 : index
    %c0_9 = arith.constant 0 : index
    %29 = vector.load %arg4[%c0_8, %c0_9] : memref<16x128xf32, #tpu.memory_space<vmem>>, vector<16x128xf32>
    tpu.vector_store %arg4[%c0_8, %c0_9], %28 {strides = array<i32>} : memref<16x128xf32, #tpu.memory_space<vmem>>, vector<16x128xf32>,
    return
  }
  func.func @transform_0(%arg0: i32, %arg1: i32) -> (i32, i32) {
    %c0_i32 = arith.constant 0 : i32
    return %arg0, %arg1 : i32, i32
  }
  func.func @transform_1(%arg0: i32, %arg1: i32) -> (i32, i32) {
    %c0_i32 = arith.constant 0 : i32
    %c0_i32_0 = arith.constant 0 : i32
    return %c0_i32, %arg1 : i32, i32
  }
  func.func @transform_2(%arg0: i32, %arg1: i32) -> (i32, i32) {
    %c0_i32 = arith.constant 0 : i32
    return %arg0, %arg1 : i32, i32
  }
}

</mosaic_0001>

<llo_original>
// kernel: tpu_custom_call.1
$region0: #{tpu_custom_call.1}
  #allocation0 [shape = 'u32[]', space=smem, size = 0x4, offset = 0x4, fixed_abs, tag = 'smem constant byte address 0x4 - core index']
  #allocation1 [shape = 'u32[144,128]{1,0:T(1,128)}', space=vmem, size = 0x12000, scoped, tag = 'internal scratch']
  %s0 = inlined_call_operand.hbm [shape: f32[16,128], index: 0, kind: input, shape index: {}]
  %s1 = inlined_call_operand.hbm [shape: f32[8,128], index: 1, kind: input, shape index: {}]
  %s2 = inlined_call_operand.hbm [shape: f32[16,128], index: 2, kind: output, shape index: {}]
  %s3 = sld [smem:[#allocation0]]
  $region26: #{tpu_custom_call.1} parent=0
    _
  %s5 = ssub.s32 1, %s3
  %s6 = scalar_select 0, %s5, %s3
  $region1: #{tpu_custom_call.1} parent=0
    #allocation2 [shape = 'u8[8192]{0}', space=vmem, size = 0x2000, scoped, tag = 'input window, operand 0, single buffered']
    #allocation3 [shape = 's32[1]{0}', space=sflag, size = 0x4, scoped, tag = 'scoped memory for tpu_custom_call.1']
    #allocation4 [shape = 's32[1]{0}', space=sflag, size = 0x4, scoped, tag = 'scoped memory for tpu_custom_call.1']
    #allocation5 [shape = 'u8[4096]{0}', space=vmem, size = 0x1000, scoped, tag = 'input window, operand 1, single buffered']
    #allocation6 [shape = 's32[1]{0}', space=sflag, size = 0x4, scoped, tag = 'scoped memory for tpu_custom_call.1']
    #allocation7 [shape = 'u8[8192]{0}', space=vmem, size = 0x2000, scoped, tag = 'output window, operand 0, single buffered']
    %7 = vsyncpa [#allocation3], 0
    %8 = vsyncpa [#allocation6], 0
    %9 = vsyncpa [#allocation4], 0
    // Predicated region
    $region2: #{tpu_custom_call.1} parent=1 // pred_check
      _
    $region3: #{tpu_custom_call.1} parent=1 // pred_check_branch
      %11 = sbr.rel (0) target = $region5
    $region4: #{tpu_custom_call.1} parent=1 // pred_region
      %s13 = ssub.s32 256, 256
      %14 = vsyncadd [#allocation3], %s13
      %s15 = sshll.u32 [#allocation2], 4
      %s16 = int_to_ptr.vmem [resolvable:$true] %s15
      %21 = dma.hbm_to_vmem [thread:$0]  %s0, 256, %s16, [#allocation3], 128, 128, 8
    $region5: #{tpu_custom_call.1} parent=1 // pred_fallthru
      _
    // Predicated region
    $region6: #{tpu_custom_call.1} parent=1 // pred_check
      _
    $region7: #{tpu_custom_call.1} parent=1 // pred_check_branch
      %23 = sbr.rel (0) target = $region9
    $region8: #{tpu_custom_call.1} parent=1 // pred_region
      %s25 = ssub.s32 128, 128
      %26 = vsyncadd [#allocation6], %s25
      %s28 = sshll.u32 [#allocation5], 4
      %s29 = int_to_ptr.vmem [resolvable:$true] %s28
      %31 = dma.hbm_to_vmem [thread:$0]  %s1, 128, %s29, [#allocation6]
    $region9: #{tpu_custom_call.1} parent=1 // pred_fallthru
      _
    // Predicated region
    $region10: #{tpu_custom_call.1} parent=1 // pred_check
      _
    $region11: #{tpu_custom_call.1} parent=1 // pred_check_branch
      %33 = sbr.rel (0) target = $region13
    $region12: #{tpu_custom_call.1} parent=1 // pred_region
      %34 = dma.done [#allocation3], 256
    $region13: #{tpu_custom_call.1} parent=1 // pred_fallthru
      _
    // Predicated region
    $region14: #{tpu_custom_call.1} parent=1 // pred_check
      _
    $region15: #{tpu_custom_call.1} parent=1 // pred_check_branch
      %36 = sbr.rel (0) target = $region17
    $region16: #{tpu_custom_call.1} parent=1 // pred_region
      %37 = dma.done [#allocation6], 128
    $region17: #{tpu_custom_call.1} parent=1 // pred_fallthru
      _
    %v38 = vld [vmem:[#allocation2] sm:$0xff]
    %v39 = vld [vmem:[#allocation2 + $0x8] sm:$0xff]
    %v40 = vld [vmem:[#allocation5] sm:$0x1]
    %v41 = vld [vmem:[#allocation5 + $0x1] sm:$0x1]
    %v42 = vld [vmem:[#allocation5 + $0x2] sm:$0x1]
    %v43 = vlaneseq
    %v44 = vshrl.u32 %v43, 7
    %v45 = vsub.s32 0, %v44
    %v46 = vrot.slane %v41, %v45
    %v47 = vsub.f32 %v38, %v46
    %v48 = vsub.f32 %v39, %v46
    %v49 = vlaneseq
    %v50 = vshrl.u32 %v49, 7
    %v51 = vsub.s32 0, %v50
    %v52 = vrot.slane %v42, %v51
    %v53 = vmul.f32 %v47, %v52
    %v54 = vmul.f32 %v48, %v52
    %v55 = vmul.f32 %v53, %v53
    %v56 = vmul.f32 %v54, %v54
    %v57 = vlaneseq
    %v58 = vshrl.u32 %v57, 7
    %v59 = vsub.s32 0, %v58
    %v60 = vrot.slane %v40, %v59
    %v61 = vsub.f32 %v60, %v55
    %v62 = vsub.f32 %v60, %v56
    %v63 = vld [vmem:[#allocation5 + $0x3] sm:$0x1]
    %v64 = vld [vmem:[#allocation5 + $0x4] sm:$0x1]
    %v65 = vld [vmem:[#allocation5 + $0x5] sm:$0x1]
    %v66 = vlaneseq
    %v67 = vshrl.u32 %v66, 7
    %v68 = vsub.s32 0, %v67
    %v69 = vrot.slane %v64, %v68
    %v70 = vsub.f32 %v38, %v69
    %v71 = vsub.f32 %v39, %v69
    %v72 = vlaneseq
    %v73 = vshrl.u32 %v72, 7
    %v74 = vsub.s32 0, %v73
    %v75 = vrot.slane %v65, %v74
    %v76 = vmul.f32 %v70, %v75
    %v77 = vmul.f32 %v71, %v75
    %v78 = vmul.f32 %v76, %v76
    %v79 = vmul.f32 %v77, %v77
    %v80 = vlaneseq
    %v81 = vshrl.u32 %v80, 7
    %v82 = vsub.s32 0, %v81
    %v83 = vrot.slane %v63, %v82
    %v84 = vsub.f32 %v83, %v78
    %v85 = vsub.f32 %v83, %v79
    %v86 = vmax.f32 %v61, %v84
    %v87 = vmax.f32 %v62, %v85
    %v88 = vsub.f32 %v61, %v84
    %v89 = vsub.f32 %v62, %v85
    %v90 = vand.u32 2147483647, %v88
    %v91 = vand.u32 2147483647, %v89
    %v92 = vsub.f32 0.0, %v90
    %v93 = vsub.f32 0.0, %v91
    %v94 = vmul.f32 %v92, 1.442695
    %v95 = vpow.pop %v94
    %v96 = vmul.f32 %v93, 1.442695
    %v97 = vpow.pop %v96
    %v98 = vadd.f32 %v95, 1.0
    %v99 = vlog2.pop %v98
    %v100 = vmul.f32 %v99, 0.6931472
    %v101 = vmul.f32 -0.5, %v95
    %v102 = vadd.f32 %v101, 1.0
    %v103 = vmul.f32 %v102, %v95
    %v104 = vand.u32 2147483647, %v95
    %vm105 = vcmp.lt.f32.partialorder %v104, 0.0004427343
    %v106 = vsel %vm105, %v103, %v100
    %v107 = vadd.f32 %v97, 1.0
    %v108 = vlog2.pop %v107
    %v109 = vmul.f32 %v108, 0.6931472
    %v110 = vmul.f32 -0.5, %v97
    %v111 = vadd.f32 %v110, 1.0
    %v112 = vmul.f32 %v111, %v97
    %v113 = vand.u32 2147483647, %v97
    %vm114 = vcmp.lt.f32.partialorder %v113, 0.0004427343
    %v115 = vsel %vm114, %v112, %v109
    %v116 = vadd.f32 %v86, %v106
    %v117 = vadd.f32 %v87, %v115
    %118 = vst [vmem:[#allocation7] sm:$0xff] %v116
    %119 = vst [vmem:[#allocation7 + $0x8] sm:$0xff] %v117
    // Predicated region
    $region18: #{tpu_custom_call.1} parent=1 // pred_check
      _
    $region19: #{tpu_custom_call.1} parent=1 // pred_check_branch
      %121 = sbr.rel (0) target = $region21
    $region20: #{tpu_custom_call.1} parent=1 // pred_region
      %s123 = ssub.s32 256, 256
      %124 = vsyncadd [#allocation4], %s123
      %s125 = sshll.u32 [#allocation7], 4
      %s126 = int_to_ptr.vmem [resolvable:$true] %s125
      %131 = dma.vmem_to_hbm [thread:$0]  %s126, 256, %s2, [#allocation4], 128, 128, 8
    $region21: #{tpu_custom_call.1} parent=1 // pred_fallthru
      _
    // Predicated region
    $region22: #{tpu_custom_call.1} parent=1 // pred_check
      _
    $region23: #{tpu_custom_call.1} parent=1 // pred_check_branch
      %133 = sbr.rel (0) target = $region25
    $region24: #{tpu_custom_call.1} parent=1 // pred_region
      %134 = dma.done [#allocation4], 256
    $region25: #{tpu_custom_call.1} parent=1 // pred_fallthru
      _
    %135 = vsyncpa [#allocation3], 1
    %136 = vsyncpa [#allocation6], 1
    %137 = vsyncpa [#allocation4], 1

</llo_original>
